<compile_context>
chip_gen: v5e
topology: v5e:2x2
jax: 0.10.0
libtpu: 0.0.40
codegen_flags: <defaults>
</compile_context>

<pallas_src>
import jax
import jax.numpy as jnp
from jax import lax
from jax.experimental import pallas as pl
from jax.experimental.pallas import tpu as pltpu

INPUT_SIZE = 10
HIDDEN_SIZES = [64, 32]
OUTPUT_SIZE = 1

_TB_CAP = 4096   # rows per grid step (VMEM stays small thanks to inner chunking)
_CHUNK = 256     # rows per inner compute chunk (keeps h1/h2 in vregs)


def _round_up(v, m):
    return ((v + m - 1) // m) * m


def _pick_batch_tile(B):
    """Batch-tile (rows per grid step)."""
    if B <= 512:
        # Single block equal to the full array dims (always layout-legal);
        # intermediates are <= (512, 64) f32 = 128 KiB, no chunking needed.
        return B
    # >= 2 grid steps so both v7x TensorCores get work; chunk-aligned rows.
    half = _round_up((B + 1) // 2, _CHUNK)
    return max(_CHUNK, min(_TB_CAP, half))


def _make_kernel(tb):
    """Build the kernel for a given batch tile size (static at trace time)."""
    if tb > _CHUNK and tb % _CHUNK == 0:
        chunk, n_chunks = _CHUNK, tb // _CHUNK
    else:
        chunk, n_chunks = tb, 1

    def kernel(x_ref, w1t_ref, b1_ref, w2t_ref, b2_ref, w3_ref, b3_ref, o_ref):
        # Resident (constant index_map) weights/biases — tiny, read once.
        w1t = w1t_ref[...]   # (10, 64) f32
        b1 = b1_ref[...]     # (1, 64)  f32
        w2t = w2t_ref[...]   # (64, 32) f32
        b2 = b2_ref[...]     # (1, 32)  f32
        w3 = w3_ref[...]     # (1, 32)  f32
        b3 = b3_ref[...]     # (1, 1)   f32

        def ffwd(xc):
            # Layer 1: (chunk, 10) @ (10, 64) -> (chunk, 64), bias, ReLU.
            h1 = jnp.maximum(
                jnp.dot(xc, w1t, preferred_element_type=jnp.float32) + b1, 0.0)
            # Layer 2: (chunk, 64) @ (64, 32) -> (chunk, 32), bias, ReLU.
            h2 = jnp.maximum(
                jnp.dot(h1, w2t, preferred_element_type=jnp.float32) + b2, 0.0)
            # Layer 3 (32 -> 1): VPU multiply + lane reduce (XLU); avoids a
            # degenerate single-column MXU matmul.
            return jnp.sum(h2 * w3, axis=-1, keepdims=True) + b3

        if n_chunks == 1:
            o_ref[...] = ffwd(x_ref[...]).astype(o_ref.dtype)
        else:
            def chunk_body(c, carry):
                r0 = pl.multiple_of(c * chunk, chunk)
                xc = x_ref[pl.ds(r0, chunk), :]
                o_ref[pl.ds(r0, chunk), :] = ffwd(xc).astype(o_ref.dtype)
                return carry

            lax.fori_loop(0, n_chunks, chunk_body, None, unroll=True)

    return kernel


def mlp_forward(x, params, *, tb=None):
    """x: (B, 10) float32; params in PyTorch layout (w: (out,in), b: (out,)).
    Returns (B, 1) float32 — same math as the nn.Sequential forward."""
    B = x.shape[0]
    if tb is None:
        tb = _pick_batch_tile(B)
    grid = (pl.cdiv(B, tb),)

    # One-time tiny weight layout plumbing (a few KiB; negligible vs x stream).
    w1t = params["w1"].T.astype(jnp.float32)               # (10, 64)
    w2t = params["w2"].T.astype(jnp.float32)               # (64, 32)
    w3 = params["w3"].reshape(1, -1).astype(jnp.float32)   # (1, 32)
    b1 = params["b1"].reshape(1, -1).astype(jnp.float32)   # (1, 64)
    b2 = params["b2"].reshape(1, -1).astype(jnp.float32)   # (1, 32)
    b3 = params["b3"].reshape(1, 1).astype(jnp.float32)    # (1, 1)

    # Constant block index -> resident in VMEM across all grid steps.
    resident = lambda a: pl.BlockSpec(a.shape, lambda i: (0, 0))

    out = pl.pallas_call(
        _make_kernel(tb),
        out_shape=jax.ShapeDtypeStruct((B, OUTPUT_SIZE), jnp.float32),
        grid=grid,
        in_specs=[
            pl.BlockSpec((tb, INPUT_SIZE), lambda i: (i, 0)),  # x batch tile
            resident(w1t), resident(b1),
            resident(w2t), resident(b2),
            resident(w3), resident(b3),
        ],
        out_specs=pl.BlockSpec((tb, OUTPUT_SIZE), lambda i: (i, 0)),
        compiler_params=pltpu.CompilerParams(
            dimension_semantics=("parallel",),   # megacore on v7x; free elsewhere
            vmem_limit_bytes=32 * 1024 * 1024),
    )(x, w1t, b1, w2t, b2, w3, b3)

    return out  # (B, 1) — consumer layout, no trailing transpose pass


def init_params(key):
    """Deterministic init mimicking nn.Linear default (U[-1/sqrt(fan_in), +]),
    stored in PyTorch layout: w (out, in), b (out,)."""
    sizes = [INPUT_SIZE] + HIDDEN_SIZES + [OUTPUT_SIZE]
    params = {}
    for i in range(len(sizes) - 1):
        fan_in, fan_out = sizes[i], sizes[i + 1]
        key, kw, kb = jax.random.split(key, 3)
        bound = 1.0 / jnp.sqrt(fan_in)
        params[f"w{i+1}"] = jax.random.uniform(
            kw, (fan_out, fan_in), jnp.float32, -bound, bound)
        params[f"b{i+1}"] = jax.random.uniform(
            kb, (fan_out,), jnp.float32, -bound, bound)
    return params


def ref_forward(x, params):
    """Pure-JAX f32 reference matching the PyTorch nn.Sequential math."""
    hp = jax.lax.Precision.HIGHEST
    h1 = jnp.maximum(
        jnp.dot(x, params["w1"].T, precision=hp) + params["b1"], 0.0)
    h2 = jnp.maximum(
        jnp.dot(h1, params["w2"].T, precision=hp) + params["b2"], 0.0)
    return jnp.dot(h2, params["w3"].T, precision=hp) + params["b3"]


def _check(B, params, key, tb=None):
    x = jax.random.normal(key, (B, INPUT_SIZE), dtype=jnp.float32)
    out = mlp_forward(x, params, tb=tb)
    jax.block_until_ready(out)
    ref = ref_forward(x, params)
    assert out.shape == (B, OUTPUT_SIZE), out.shape
    assert jnp.all(jnp.isfinite(out)), "non-finite values leaked into output"
    err = jnp.max(jnp.abs(out - ref))
    assert jnp.allclose(out, ref, atol=5e-4, rtol=5e-4), f"max abs err {err}"
    return out


if __name__ == "__main__":
    key = jax.random.PRNGKey(0)
    key, kx1, kx2 = jax.random.split(key, 3)
    params = init_params(key)

    # Small primary case: single full-batch block (B = 8).
    _check(8, params, kx1)

    # Partial-tile / multi-step case: B not a multiple of 8 or 128, tb = 512
    # -> grid of 2 steps, partial last block, inner 256-row chunk loop.
    _check(601, params, kx2)

    print("KERNEL_OK")
</pallas_src>

<mosaic_0001>
module attributes {stable_mosaic.version = 11 : i64} {
  func.func @kernel(%arg0: i32, %arg1: memref<8x10xf32, #tpu.memory_space<vmem>>, %arg2: memref<10x64xf32, #tpu.memory_space<vmem>>, %arg3: memref<1x64xf32, #tpu.memory_space<vmem>>, %arg4: memref<64x32xf32, #tpu.memory_space<vmem>>, %arg5: memref<1x32xf32, #tpu.memory_space<vmem>>, %arg6: memref<1x32xf32, #tpu.memory_space<vmem>>, %arg7: memref<1x1xf32, #tpu.memory_space<vmem>>, %arg8: memref<8x1xf32, #tpu.memory_space<vmem>>) attributes {dimension_semantics = [#tpu.dimension_semantics<parallel>], iteration_bounds = array<i64: 1>, scalar_prefetch = 0 : i64, scratch_operands = 0 : i64, tpu.core_type = #tpu.core_type<tc>, window_params = [{transform_indices = @transform_0, window_bounds = array<i64: 8, 10>}, {pipeline_mode = #tpu.pipeline_mode<synchronous>, transform_indices = @transform_1, window_bounds = array<i64: 10, 64>}, {pipeline_mode = #tpu.pipeline_mode<synchronous>, transform_indices = @transform_2, window_bounds = array<i64: 1, 64>}, {pipeline_mode = #tpu.pipeline_mode<synchronous>, transform_indices = @transform_3, window_bounds = array<i64: 64, 32>}, {pipeline_mode = #tpu.pipeline_mode<synchronous>, transform_indices = @transform_4, window_bounds = array<i64: 1, 32>}, {pipeline_mode = #tpu.pipeline_mode<synchronous>, transform_indices = @transform_5, window_bounds = array<i64: 1, 32>}, {pipeline_mode = #tpu.pipeline_mode<synchronous>, transform_indices = @transform_6, window_bounds = array<i64: 1, 1>}, {transform_indices = @transform_7, window_bounds = array<i64: 8, 1>}]} {
    %c0 = arith.constant 0 : index
    %c0_0 = arith.constant 0 : index
    %0 = vector.load %arg2[%c0, %c0_0] : memref<10x64xf32, #tpu.memory_space<vmem>>, vector<10x64xf32>
    %c0_1 = arith.constant 0 : index
    %c0_2 = arith.constant 0 : index
    %1 = vector.load %arg3[%c0_1, %c0_2] : memref<1x64xf32, #tpu.memory_space<vmem>>, vector<1x64xf32>
    %c0_3 = arith.constant 0 : index
    %c0_4 = arith.constant 0 : index
    %2 = vector.load %arg4[%c0_3, %c0_4] : memref<64x32xf32, #tpu.memory_space<vmem>>, vector<64x32xf32>
    %c0_5 = arith.constant 0 : index
    %c0_6 = arith.constant 0 : index
    %3 = vector.load %arg5[%c0_5, %c0_6] : memref<1x32xf32, #tpu.memory_space<vmem>>, vector<1x32xf32>
    %c0_7 = arith.constant 0 : index
    %c0_8 = arith.constant 0 : index
    %4 = vector.load %arg6[%c0_7, %c0_8] : memref<1x32xf32, #tpu.memory_space<vmem>>, vector<1x32xf32>
    %c0_9 = arith.constant 0 : index
    %c0_10 = arith.constant 0 : index
    %5 = vector.load %arg7[%c0_9, %c0_10] : memref<1x1xf32, #tpu.memory_space<vmem>>, vector<1x1xf32>
    %c0_11 = arith.constant 0 : index
    %c0_12 = arith.constant 0 : index
    %6 = vector.load %arg1[%c0_11, %c0_12] : memref<8x10xf32, #tpu.memory_space<vmem>>, vector<8x10xf32>
    %cst = arith.constant dense<0.000000e+00> : vector<8x64xf32>
    %7 = tpu.matmul %6, %0, %cst {dimension_numbers = #tpu.dot_dimension_numbers<[1], [0], [0], [1], [0, 0, 1, 1], [], []>} : vector<8x10xf32>, vector<10x64xf32>, vector<8x64xf32> -> vector<8x64xf32>
    %8 = vector.broadcast %1 : vector<1x64xf32> to vector<8x64xf32>
    %9 = arith.addf %7, %8 : vector<8x64xf32>
    %cst_13 = arith.constant 0.000000e+00 : f32
    %10 = vector.broadcast %cst_13 : f32 to vector<8x64xf32>
    %11 = arith.maximumf %9, %10 : vector<8x64xf32>
    %cst_14 = arith.constant dense<0.000000e+00> : vector<8x32xf32>
    %12 = tpu.matmul %11, %2, %cst_14 {dimension_numbers = #tpu.dot_dimension_numbers<[1], [0], [0], [1], [0, 0, 1, 1], [], []>} : vector<8x64xf32>, vector<64x32xf32>, vector<8x32xf32> -> vector<8x32xf32>
    %13 = vector.broadcast %3 : vector<1x32xf32> to vector<8x32xf32>
    %14 = arith.addf %12, %13 : vector<8x32xf32>
    %cst_15 = arith.constant 0.000000e+00 : f32
    %15 = vector.broadcast %cst_15 : f32 to vector<8x32xf32>
    %16 = arith.maximumf %14, %15 : vector<8x32xf32>
    %17 = vector.broadcast %4 : vector<1x32xf32> to vector<8x32xf32>
    %18 = arith.mulf %16, %17 : vector<8x32xf32>
    %cst_16 = arith.constant dense<0.000000e+00> : vector<8xf32>
    %19 = vector.multi_reduction <add>, %18, %cst_16 [1] : vector<8x32xf32> to vector<8xf32>
    %20 = vector.shape_cast %19 : vector<8xf32> to vector<8x1xf32>
    %21 = vector.broadcast %5 : vector<1x1xf32> to vector<8x1xf32>
    %22 = arith.addf %20, %21 : vector<8x1xf32>
    %c0_17 = arith.constant 0 : index
    %c0_18 = arith.constant 0 : index
    %23 = vector.load %arg8[%c0_17, %c0_18] : memref<8x1xf32, #tpu.memory_space<vmem>>, vector<8x1xf32>
    tpu.vector_store %arg8[%c0_17, %c0_18], %22 {strides = array<i32>} : memref<8x1xf32, #tpu.memory_space<vmem>>, vector<8x1xf32>,
    return
  }
  func.func @transform_0(%arg0: i32) -> (i32, i32) {
    %c0_i32 = arith.constant 0 : i32
    %c0_i32_0 = arith.constant 0 : i32
    return %arg0, %c0_i32 : i32, i32
  }
  func.func @transform_1(%arg0: i32) -> (i32, i32) {
    %c0_i32 = arith.constant 0 : i32
    %c0_i32_0 = arith.constant 0 : i32
    %c0_i32_1 = arith.constant 0 : i32
    return %c0_i32, %c0_i32_0 : i32, i32
  }
  func.func @transform_2(%arg0: i32) -> (i32, i32) {
    %c0_i32 = arith.constant 0 : i32
    %c0_i32_0 = arith.constant 0 : i32
    %c0_i32_1 = arith.constant 0 : i32
    return %c0_i32, %c0_i32_0 : i32, i32
  }
  func.func @transform_3(%arg0: i32) -> (i32, i32) {
    %c0_i32 = arith.constant 0 : i32
    %c0_i32_0 = arith.constant 0 : i32
    %c0_i32_1 = arith.constant 0 : i32
    return %c0_i32, %c0_i32_0 : i32, i32
  }
  func.func @transform_4(%arg0: i32) -> (i32, i32) {
    %c0_i32 = arith.constant 0 : i32
    %c0_i32_0 = arith.constant 0 : i32
    %c0_i32_1 = arith.constant 0 : i32
    return %c0_i32, %c0_i32_0 : i32, i32
  }
  func.func @transform_5(%arg0: i32) -> (i32, i32) {
    %c0_i32 = arith.constant 0 : i32
    %c0_i32_0 = arith.constant 0 : i32
    %c0_i32_1 = arith.constant 0 : i32
    return %c0_i32, %c0_i32_0 : i32, i32
  }
  func.func @transform_6(%arg0: i32) -> (i32, i32) {
    %c0_i32 = arith.constant 0 : i32
    %c0_i32_0 = arith.constant 0 : i32
    %c0_i32_1 = arith.constant 0 : i32
    return %c0_i32, %c0_i32_0 : i32, i32
  }
  func.func @transform_7(%arg0: i32) -> (i32, i32) {
    %c0_i32 = arith.constant 0 : i32
    %c0_i32_0 = arith.constant 0 : i32
    return %arg0, %c0_i32 : i32, i32
  }
}

</mosaic_0001>

<llo_original>
// kernel: tpu_custom_call.1
$region0: #{tpu_custom_call.1}
  #allocation0 [shape = 'u32[]', space=smem, size = 0x4, offset = 0x4, fixed_abs, tag = 'smem constant byte address 0x4 - core index']
  #allocation1 [shape = 'u32[72,128]{1,0:T(1,128)}', space=vmem, size = 0x9000, scoped, tag = 'internal scratch']
  #allocation2 [shape = 'f32[1,1]{1,0:T(1,128)S(1)}', space=vmem, size = 0x200, scoped, tag = 'scoped memory for tpu_custom_call.1']
  %s0 = inlined_call_operand.vmem [shape: f32[8,10], index: 0, kind: input, shape index: {}]
  %s1 = inlined_call_operand.vmem [shape: f32[10,64], index: 1, kind: input, shape index: {}]
  %s2 = inlined_call_operand.vmem [shape: f32[1,64], index: 2, kind: input, shape index: {}]
  %s3 = inlined_call_operand.vmem [shape: f32[64,32], index: 3, kind: input, shape index: {}]
  %s4 = inlined_call_operand.vmem [shape: f32[1,32], index: 4, kind: input, shape index: {}]
  %s5 = inlined_call_operand.vmem [shape: f32[1,32], index: 5, kind: input, shape index: {}]
  %s6 = inlined_call_operand.<no memory space> [shape: f32[1,1], index: 6, kind: input, shape index: {}]
  %s7 = inlined_call_operand.vmem [shape: f32[8,1], index: 7, kind: output, shape index: {}]
  %s8 = sld [smem:[#allocation0]]
  $region38: #{tpu_custom_call.1} parent=0
    _
  %s10 = ssub.s32 1, %s8
  %s11 = scalar_select 0, %s10, %s8
  %v12 = vstv %s6
  %13 = vst [vmem:[#allocation2] sm:$0x1] %v12
  // Predicated region
  $region2: #{tpu_custom_call.1} parent=0 // pred_check
    _
  $region3: #{tpu_custom_call.1} parent=0 // pred_check_branch
    %15 = sbr.rel (0) target = $region5
  $region4: #{tpu_custom_call.1} parent=0 // pred_region
    _
  $region5: #{tpu_custom_call.1} parent=0 // pred_fallthru
    _
  // Predicated region
  $region6: #{tpu_custom_call.1} parent=0 // pred_check
    _
  $region7: #{tpu_custom_call.1} parent=0 // pred_check_branch
    %17 = sbr.rel (0) target = $region9
  $region8: #{tpu_custom_call.1} parent=0 // pred_region
    _
  $region9: #{tpu_custom_call.1} parent=0 // pred_fallthru
    _
  // Predicated region
  $region10: #{tpu_custom_call.1} parent=0 // pred_check
    _
  $region11: #{tpu_custom_call.1} parent=0 // pred_check_branch
    %19 = sbr.rel (0) target = $region13
  $region12: #{tpu_custom_call.1} parent=0 // pred_region
    _
  $region13: #{tpu_custom_call.1} parent=0 // pred_fallthru
    _
  // Predicated region
  $region14: #{tpu_custom_call.1} parent=0 // pred_check
    _
  $region15: #{tpu_custom_call.1} parent=0 // pred_check_branch
    %21 = sbr.rel (0) target = $region17
  $region16: #{tpu_custom_call.1} parent=0 // pred_region
    _
  $region17: #{tpu_custom_call.1} parent=0 // pred_fallthru
    _
  // Predicated region
  $region18: #{tpu_custom_call.1} parent=0 // pred_check
    _
  $region19: #{tpu_custom_call.1} parent=0 // pred_check_branch
    %23 = sbr.rel (0) target = $region21
  $region20: #{tpu_custom_call.1} parent=0 // pred_region
    _
  $region21: #{tpu_custom_call.1} parent=0 // pred_fallthru
    _
  // Predicated region
  $region22: #{tpu_custom_call.1} parent=0 // pred_check
    _
  $region23: #{tpu_custom_call.1} parent=0 // pred_check_branch
    %25 = sbr.rel (0) target = $region25
  $region24: #{tpu_custom_call.1} parent=0 // pred_region
    _
  $region25: #{tpu_custom_call.1} parent=0 // pred_fallthru
    _
  // Predicated region
  $region26: #{tpu_custom_call.1} parent=0 // pred_check
    _
  $region27: #{tpu_custom_call.1} parent=0 // pred_check_branch
    %27 = sbr.rel (0) target = $region29
  $region28: #{tpu_custom_call.1} parent=0 // pred_region
    _
  $region29: #{tpu_custom_call.1} parent=0 // pred_fallthru
    _
  %v28 = vld [vmem:[%s1] sm:$0xff]
  %v29 = vld [vmem:[%s1 + $0x8] sm:$0x3]
  %v30 = vld [vmem:[%s2] sm:$0x1]
  %v31 = vld [vmem:[%s3] sm:$0xff]
  %v32 = vld [vmem:[%s3 + $0x8] sm:$0xff]
  %v33 = vld [vmem:[%s3 + $0x10] sm:$0xff]
  %v34 = vld [vmem:[%s3 + $0x18] sm:$0xff]
  %v35 = vld [vmem:[%s3 + $0x20] sm:$0xff]
  %v36 = vld [vmem:[%s3 + $0x28] sm:$0xff]
  %v37 = vld [vmem:[%s3 + $0x30] sm:$0xff]
  %v38 = vld [vmem:[%s3 + $0x38] sm:$0xff]
  %v39 = vld [vmem:[%s4] sm:$0x1]
  %v40 = vld [vmem:[%s5] sm:$0x1]
  %v41 = vld [vmem:[#allocation2] sm:$0x1]
  %v42 = vld [vmem:[%s0] sm:$0xff]
  %v44 = vperm.slane %v30, 0
  %vm46 = vcmask 80896
  %v48 = vsel %vm46, %v42, 0
  %vm50 = vcmask 1041408
  %v52 = vsel %vm50, %v29, 0
  %54 = vmatpush.msra.mxu0 0.0
  %55 = vmatpush.msra.mxu0 0.0
  %56 = vmatpush.msra.mxu0 0.0
  %57 = vmatpush.msra.mxu0 0.0
  %58 = vmatpush.msra.mxu0 0.0
  %59 = vmatpush.msra.mxu0 0.0
  %60 = vmatpush.msra.mxu0 0.0
  %61 = vmatpush.msra.mxu0 0.0
  %62 = vmatpush.msra.mxu0 0.0
  %63 = vmatpush.msra.mxu0 0.0
  %64 = vmatpush.msra.mxu0 0.0
  %65 = vmatpush.msra.mxu0 0.0
  %66 = vmatpush.msra.mxu0 0.0
  %67 = vmatpush.msra.mxu0 0.0
  %68 = vmatpush.msra.mxu0 %v52
  %69 = vmatpush.msra.mxu0 %v28
  %70 = vmatmul.f32.gmra.mxu0 %v48
  %v71 = vpop.f32.mrf.mxu0
  %v72 = vadd.f32 %v44, %v71
  %73 = vdwg.mxu0
  %v74 = vmax.f32 %v72, 0.0
  %v76 = vperm.slane %v39, 0
  %vm78 = vcmask 523264
  %v80 = vsel %vm78, %v74, 0
  %82 = vmatpush.msra.mxu0 0.0
  %83 = vmatpush.msra.mxu0 0.0
  %84 = vmatpush.msra.mxu0 0.0
  %85 = vmatpush.msra.mxu0 0.0
  %86 = vmatpush.msra.mxu0 0.0
  %87 = vmatpush.msra.mxu0 0.0
  %88 = vmatpush.msra.mxu0 0.0
  %89 = vmatpush.msra.mxu0 0.0
  %90 = vmatpush.msra.mxu0 %v38
  %91 = vmatpush.msra.mxu0 %v37
  %92 = vmatpush.msra.mxu0 %v36
  %93 = vmatpush.msra.mxu0 %v35
  %94 = vmatpush.msra.mxu0 %v34
  %95 = vmatpush.msra.mxu0 %v33
  %96 = vmatpush.msra.mxu0 %v32
  %97 = vmatpush.msra.mxu0 %v31
  %98 = vmatmul.f32.gmra.mxu0 %v80
  %v99 = vpop.f32.mrf.mxu0
  %v100 = vadd.f32 %v76, %v99
  %101 = vdwg.mxu0
  %v102 = vmax.f32 %v100, 0.0
  %v104 = vperm.slane %v40, 0
  %v106 = vmul.f32 %v102, %v104
  %vm107 = vcmask 261120
  %v108 = vsel %vm107, %v106, 0.0
  %109 = vadd.xlane.f32.xlu0 %v108
  %v110 = vpop.xlane.xlu0 %109
  %v112 = vperm.slane %v41, 0
  %v114 = vadd.f32 %v110, %v112
  %vm115 = vcmask 7168
  %116 = vst.msk [vmem:[%s7] sm:$0xff] %vm115, %v114
  // Predicated region
  $region30: #{tpu_custom_call.1} parent=0 // pred_check
    _
  $region31: #{tpu_custom_call.1} parent=0 // pred_check_branch
    %118 = sbr.rel (0) target = $region33
  $region32: #{tpu_custom_call.1} parent=0 // pred_region
    _
  $region33: #{tpu_custom_call.1} parent=0 // pred_fallthru
    _
  // Predicated region
  $region34: #{tpu_custom_call.1} parent=0 // pred_check
    _
  $region35: #{tpu_custom_call.1} parent=0 // pred_check_branch
    %120 = sbr.rel (0) target = $region37
  $region36: #{tpu_custom_call.1} parent=0 // pred_region
    _
  $region37: #{tpu_custom_call.1} parent=0 // pred_fallthru
    _

</llo_original>
